<compile_context>
chip_gen: v7x
topology: tpu7x:2x2x1
jax: 0.10.0
libtpu: 0.0.40
codegen_flags: <defaults>
</compile_context>

<pallas_src>
import jax
import jax.numpy as jnp
from jax.experimental import pallas as pl
from jax.experimental.pallas import tpu as pltpu

LANE = 1024            # lane-dense row width (multiple of 128, == block width)
MAX_TILE_ROWS = 1024   # 1024 x 1024 f32 = 4 MiB block
MIN_KERNEL_ELEMS = 16384  # below this a single fused XLA FMA beats any launch


def _affine_kernel(x_ref, wb_ref, o_ref):
    # x_ref/o_ref: (tile_rows, LANE) VMEM tiles; wb_ref: (2,) f32 SMEM = [w, b].
    w = wb_ref[0]
    b = wb_ref[1]
    o_ref[...] = (x_ref[...].astype(jnp.float32) * w + b).astype(o_ref.dtype)


def _pick_tile_rows(rows):
    """Prefer 4 MiB blocks; for modest inputs split into ~2 balanced row-tiles
    so both v7x TensorCores get work. Always a multiple of 8 (sublane)."""
    if rows >= 2 * MAX_TILE_ROWS:
        return MAX_TILE_ROWS
    half = (rows + 1) // 2
    return max(8, min(MAX_TILE_ROWS, ((half + 7) // 8) * 8))


def _affine_pallas(x2d, wb):
    """y = x*w + b over a lane-dense (rows, LANE) array; ragged last block OK."""
    rows, lane = x2d.shape
    tile_rows = _pick_tile_rows(rows)
    n_padded = rows * lane

    return pl.pallas_call(
        _affine_kernel,
        out_shape=jax.ShapeDtypeStruct((rows, lane), x2d.dtype),
        grid=(pl.cdiv(rows, tile_rows),),        # ragged last block handled by Pallas
        in_specs=[
            pl.BlockSpec((tile_rows, lane), lambda i: (i, 0)),  # x tile (VMEM)
            pl.BlockSpec(memory_space=pltpu.SMEM),              # [w, b] scalars
        ],
        out_specs=pl.BlockSpec((tile_rows, lane), lambda i: (i, 0)),
        compiler_params=pltpu.CompilerParams(
            dimension_semantics=("parallel",),   # v7x: both TCs share the grid
            vmem_limit_bytes=32 << 20,           # needed for 4 MiB blocks on v5e
        ),
        cost_estimate=pl.CostEstimate(
            flops=2 * n_padded, transcendentals=0, bytes_accessed=8 * n_padded),
    )(x2d, wb)


def single_linear_regression(x, weight, bias, *, force_kernel=False):
    """Forward of nn.Linear(1, 1): out = x @ W^T + b.

    x: (N, 1) float32; weight: (1, 1); bias: (1,). Returns (N, 1).
    """
    # Keep scalar params in float32 (32-bit SMEM scalars); cast inside kernel.
    wb = jnp.concatenate([weight.reshape(-1), bias.reshape(-1)]).astype(jnp.float32)

    n_elems = x.size
    if n_elems < MIN_KERNEL_ELEMS and not force_kernel:
        # Tiny batches: a single fused XLA FMA is strictly faster than a launch.
        return (x.astype(jnp.float32) * wb[0] + wb[1]).astype(x.dtype)

    # Lane-dense path: flatten, pad only to a multiple of LANE (if needed),
    # run the tiled kernel with a cdiv grid, slice back only if we padded.
    flat = x.reshape(-1)
    pad = (-n_elems) % LANE
    if pad:
        flat = jnp.pad(flat, (0, pad))
    rows = (n_elems + pad) // LANE

    out2d = _affine_pallas(flat.reshape(rows, LANE), wb)
    out_flat = out2d.reshape(-1)
    if pad:
        out_flat = out_flat[:n_elems]
    return out_flat.reshape(x.shape)


if __name__ == "__main__":
    key = jax.random.PRNGKey(0)
    kx, kw, kb, kx2, kx3 = jax.random.split(key, 5)

    # Deterministic parameters matching nn.Linear(1, 1) shapes.
    weight = jax.random.uniform(kw, (1, 1), jnp.float32, -1.0, 1.0)
    bias = jax.random.uniform(kb, (1,), jnp.float32, -1.0, 1.0)

    # 1) Small batch of scalar samples (module's typical use): fast fused path.
    x_small = jax.random.normal(kx, (8, 1), jnp.float32)
    out_small = jax.block_until_ready(single_linear_regression(x_small, weight, bias))
    ref_small = x_small @ weight.T + bias
    assert out_small.shape == (8, 1)
    assert jnp.allclose(out_small, ref_small, atol=1e-6), "small-batch mismatch"

    # 2) Unaligned batch: exercises pad-to-LANE + ragged last block + 2-step grid.
    n_un = 40_000  # not a multiple of LANE
    x_un = jax.random.normal(kx2, (n_un, 1), jnp.float32)
    out_un = jax.block_until_ready(single_linear_regression(x_un, weight, bias))
    ref_un = x_un @ weight.T + bias
    assert out_un.shape == (n_un, 1)
    assert jnp.allclose(out_un, ref_un, atol=1e-5), "unaligned kernel-path mismatch"

    # 3) LANE-aligned batch: kernel path with zero padding and no output slice.
    n_al = 16 * LANE
    x_al = jax.random.normal(kx3, (n_al, 1), jnp.float32)
    out_al = jax.block_until_ready(single_linear_regression(x_al, weight, bias))
    ref_al = x_al @ weight.T + bias
    assert out_al.shape == (n_al, 1)
    assert jnp.allclose(out_al, ref_al, atol=1e-5), "aligned kernel-path mismatch"

    print("KERNEL_OK")
</pallas_src>

<mosaic_0001>
module attributes {stable_mosaic.version = 11 : i64} {
  func.func @_affine_kernel(%arg0: i32, %arg1: memref<24x1024xf32, #tpu.memory_space<vmem>>, %arg2: memref<2xf32, #tpu.memory_space<smem>>, %arg3: memref<24x1024xf32, #tpu.memory_space<vmem>>) attributes {dimension_semantics = [#tpu.dimension_semantics<parallel>], iteration_bounds = array<i64: 2>, scalar_prefetch = 0 : i64, scratch_operands = 0 : i64, tpu.core_type = #tpu.core_type<tc>, window_params = [{transform_indices = @transform_0, window_bounds = array<i64: 24, 1024>}, {transform_indices = @transform_1, window_bounds = array<i64: 2>}, {transform_indices = @transform_2, window_bounds = array<i64: 24, 1024>}]} {
    %c0 = arith.constant 0 : index
    %0 = memref.load %arg2[%c0] : memref<2xf32, #tpu.memory_space<smem>>
    %c1 = arith.constant 1 : index
    %1 = memref.load %arg2[%c1] : memref<2xf32, #tpu.memory_space<smem>>
    %c0_0 = arith.constant 0 : index
    %c0_1 = arith.constant 0 : index
    %2 = vector.load %arg1[%c0_0, %c0_1] : memref<24x1024xf32, #tpu.memory_space<vmem>>, vector<24x1024xf32>
    %3 = vector.broadcast %0 : f32 to vector<24x1024xf32>
    %4 = arith.mulf %2, %3 : vector<24x1024xf32>
    %5 = vector.broadcast %1 : f32 to vector<24x1024xf32>
    %6 = arith.addf %4, %5 : vector<24x1024xf32>
    %c0_2 = arith.constant 0 : index
    %c0_3 = arith.constant 0 : index
    %7 = vector.load %arg3[%c0_2, %c0_3] : memref<24x1024xf32, #tpu.memory_space<vmem>>, vector<24x1024xf32>
    tpu.vector_store %arg3[%c0_2, %c0_3], %6 {strides = array<i32>} : memref<24x1024xf32, #tpu.memory_space<vmem>>, vector<24x1024xf32>,
    return
  }
  func.func @transform_0(%arg0: i32) -> (i32, i32) {
    %c0_i32 = arith.constant 0 : i32
    %c0_i32_0 = arith.constant 0 : i32
    return %arg0, %c0_i32 : i32, i32
  }
  func.func @transform_1(%arg0: i32) -> i32 {
    %c0_i32 = arith.constant 0 : i32
    %c0_i32_0 = arith.constant 0 : i32
    return %c0_i32 : i32
  }
  func.func @transform_2(%arg0: i32) -> (i32, i32) {
    %c0_i32 = arith.constant 0 : i32
    %c0_i32_0 = arith.constant 0 : i32
    return %arg0, %c0_i32 : i32, i32
  }
}

</mosaic_0001>

<llo_original>
// kernel: tpu_custom_call.1
$region0: #{tpu_custom_call.1}
  #allocation0 [shape = 'u32[]', space=smem, size = 0x4, offset = 0x4, fixed_abs, tag = 'smem constant byte address 0x4 - core index']
  #allocation1 [shape = 'u32[144,128]{1,0:T(1,128)}', space=vmem, size = 0x12000, scoped, tag = 'internal scratch']
  %s0 = inlined_call_operand.hbm [shape: f32[40,1024], index: 0, kind: input, shape index: {}]
  %s1 = inlined_call_operand.vmem [shape: f32[2], index: 1, kind: input, shape index: {}]
  %s2 = inlined_call_operand.hbm [shape: f32[40,1024], index: 2, kind: output, shape index: {}]
  %s3 = sld [smem:[#allocation0]]
  $region49: #{tpu_custom_call.1} parent=0
    _
  %s5 = ssub.s32 1, %s3
  %s6 = scalar_select 0, %s5, %s3
  $region1: #{tpu_custom_call.1} parent=0
    #allocation2 [shape = 'u8[196608]{0}', space=vmem, size = 0x30000, scoped, tag = 'input window, operand 0']
    #allocation3 [shape = 's32[2]{0}', space=sflag, size = 0x8, scoped, tag = 'scoped memory for tpu_custom_call.1']
    #allocation4 [shape = 's32[2]{0}', space=sflag, size = 0x8, scoped, tag = 'scoped memory for tpu_custom_call.1']
    #allocation5 [shape = 's32[2]{0}', space=sflag, size = 0x8, scoped, tag = 'scoped memory for tpu_custom_call.1']
    #allocation6 [shape = 'u8[512]{0}', space=smem, size = 0x200, scoped, tag = 'input window, operand 1, single buffered']
    #allocation7 [shape = 'u8[196608]{0}', space=vmem, size = 0x30000, scoped, tag = 'output window, operand 0']
    %7 = vsyncpa [#allocation3], 0
    %s8 = scalar_lea.sflag [#allocation3], 1
    %9 = vsyncpa %s8, 0
    %10 = vsyncpa [#allocation5], 0
    %11 = vsyncpa [#allocation4], 0
    %s12 = scalar_lea.sflag [#allocation4], 1
    %13 = vsyncpa %s12, 0
    loop: start=0, step=1, limit=4
    $region2: #{tpu_custom_call.1} parent=1 // loop_pre_header
      _
    $region3: #{tpu_custom_call.1} parent=1 // loop_header
      %s15 = sphi 0, %s19
      %p16 = scmp.ge.s32.totalorder %s15, 4
      %s25 = sphi 0, %s27
      %s28 = sphi 0, %s25
      %s29 = sphi 0, %s28
      %s45 = sphi 0, %s29
      %s49 = sphi 0, %s49
      %s51 = sphi 0, %s49
      %s52 = sphi 0, %s51
      %s66 = sphi 0, %s52
      %s72 = sphi 0, %s74
      %s75 = sphi 0, %s72
      %s76 = sphi 0, %s75
      %s92 = sphi 0, %s76
    $region4: #{tpu_custom_call.1} parent=1 // loop_header_branch
      %18 = sbr.rel (%p16) target = $region8
    $region5: #{tpu_custom_call.1} parent=1 // loop_body
      %s20 = ssub.s32 %s15, 1
      %s21 = ssub.s32 %s15, 2
      %s22 = sadd.s32 %s15, 1
      %s23 = ssub.s32 %s15, %s22
      %p24 = scmp.eq.s32.totalorder %s23, 0
      %s26 = sadd.s32 %s25, 1
      %s27 = scalar_select %p24, %s25, %s26
      %p30 = pneg %p24
      %p31 = scmp.eq.s32.totalorder %s15, 1
      %p32 = por %p30, %p31
      %p33 = scmp.ne.s32.totalorder %s25, %s28
      %p34 = scmp.eq.s32.totalorder %s15, 0
      %p35 = por %p33, %p34
      %p36 = scmp.ne.s32.totalorder %s25, %s28
      %p37 = scmp.eq.s32.totalorder %s20, 1
      %p38 = por %p36, %p37
      %p39 = scmp.ne.s32.totalorder %s28, %s29
      %p40 = scmp.eq.s32.totalorder %s20, 0
      %p41 = por %p39, %p40
      %p42 = scmp.ne.s32.totalorder %s28, %s29
      %p43 = scmp.eq.s32.totalorder %s21, 1
      %p44 = por %p42, %p43
      %p46 = scmp.ne.s32.totalorder %s29, %s45
      %p47 = scmp.eq.s32.totalorder %s21, 0
      %p48 = por %p46, %p47
      %s50 = sadd.s32 %s49, 1
      %p53 = scmp.eq.s32.totalorder %s15, 1
      %p54 = scmp.ne.s32.totalorder %s49, %s51
      %p55 = scmp.eq.s32.totalorder %s15, 0
      %p56 = por %p54, %p55
      %p57 = scmp.ne.s32.totalorder %s49, %s51
      %p58 = scmp.eq.s32.totalorder %s20, 1
      %p59 = por %p57, %p58
      %p60 = scmp.ne.s32.totalorder %s51, %s52
      %p61 = scmp.eq.s32.totalorder %s20, 0
      %p62 = por %p60, %p61
      %p63 = scmp.ne.s32.totalorder %s51, %s52
      %p64 = scmp.eq.s32.totalorder %s21, 1
      %p65 = por %p63, %p64
      %p67 = scmp.ne.s32.totalorder %s52, %s66
      %p68 = scmp.eq.s32.totalorder %s21, 0
      %p69 = por %p67, %p68
      %s70 = ssub.s32 %s15, %s22
      %p71 = scmp.eq.s32.totalorder %s70, 0
      %s73 = sadd.s32 %s72, 1
      %s74 = scalar_select %p71, %s72, %s73
      %p77 = pneg %p71
      %p78 = scmp.eq.s32.totalorder %s15, 1
      %p79 = por %p77, %p78
      %p80 = scmp.ne.s32.totalorder %s72, %s75
      %p81 = scmp.eq.s32.totalorder %s15, 0
      %p82 = por %p80, %p81
      %p83 = scmp.ne.s32.totalorder %s72, %s75
      %p84 = scmp.eq.s32.totalorder %s20, 1
      %p85 = por %p83, %p84
      %p86 = scmp.ne.s32.totalorder %s75, %s76
      %p87 = scmp.eq.s32.totalorder %s20, 0
      %p88 = por %p86, %p87
      %p89 = scmp.ne.s32.totalorder %s75, %s76
      %p90 = scmp.eq.s32.totalorder %s21, 1
      %p91 = por %p89, %p90
      %p93 = scmp.ne.s32.totalorder %s76, %s92
      %p94 = scmp.eq.s32.totalorder %s21, 0
      %p95 = por %p93, %p94
      %p96 = scmp.le.s32.totalorder 1, %s15
      %p97 = scmp.lt.s32.totalorder %s15, 3
      %p98 = pnand %p96, %p97
      %p99 = pneg %p98
      // Predicated region
      $region9: #{tpu_custom_call.1} parent=5 // pred_check
        _
      $region10: #{tpu_custom_call.1} parent=5 // pred_check_branch
        %101 = sbr.rel (%p98) target = $region12
      $region11: #{tpu_custom_call.1} parent=5 // pred_region
        %s102 = ssub.s32 %s15, 1
        // Predicated region
        $region13: #{tpu_custom_call.1} parent=11 // pred_check
          %p103 = pneg %p62
        $region14: #{tpu_custom_call.1} parent=11 // pred_check_branch
          %105 = sbr.rel (%p103) target = $region16
        $region15: #{tpu_custom_call.1} parent=11 // pred_region
          %s107 = ssub.s32 16, 16
          %108 = vsyncadd [#allocation5], %s107
          %s110 = sshll.u32 %s1, 4
          %s111 = int_to_ptr.vmem [resolvable:$true] %s110
          %113 = dma.vmem_to_smem %s111, 16, [#allocation6], [#allocation5]
        $region16: #{tpu_custom_call.1} parent=11 // pred_fallthru
          _
      $region12: #{tpu_custom_call.1} parent=5 // pred_fallthru
        _
      %p114 = scmp.lt.s32.totalorder %s15, 2
      // Predicated region
      $region17: #{tpu_custom_call.1} parent=5 // pred_check
        %p115 = pneg %p114
      $region18: #{tpu_custom_call.1} parent=5 // pred_check_branch
        %117 = sbr.rel (%p115) target = $region20
      $region19: #{tpu_custom_call.1} parent=5 // pred_region
        // Predicated region
        $region21: #{tpu_custom_call.1} parent=19 // pred_check
          %p118 = pneg %p35
        $region22: #{tpu_custom_call.1} parent=19 // pred_check_branch
          %120 = sbr.rel (%p118) target = $region24
        $region23: #{tpu_custom_call.1} parent=19 // pred_region
          %s121 = sand.u32 %s25, 1
          %s122 = scalar_lea.sflag [#allocation3], %s121
          %s123 = sand.u32 %s25, 1
          %s124 = smul.addr %s123, 192
          %s125 = scalar_lea.vmem [#allocation2], %s124
          %s126 = smul.u32 3, %s15
          %s127 = ssub.s32 5, %s126
          %p128 = scmp.lt.s32.totalorder %s127, 3
          %s129 = scalar_select %p128, %s127, 3
          %s130 = smul.u32 128, %s129
          %s131 = smul.u32 %s130, 8
          %s133 = ssub.s32 3072, %s131
          %134 = vsyncadd %s122, %s133
          %p135 = scmp.ne.s32.totalorder 0, %s131
          %s136 = smul.addr %s126, 8
          %s137 = smul.addr %s136, 128
          %s138 = scalar_lea.hbm %s0, %s137
          %s139 = smul.u32 64, %s129
          %s140 = sshll.u32 %s125, 4
          %s141 = int_to_ptr.vmem [resolvable:$true] %s140
          %s142 = sshll.u32 %s139, 4
          %146 = dma.hbm_to_vmem [thread:$0]  (%p135), %s138, %s142, %s141, %s122, 1024, 1024, 64
        $region24: #{tpu_custom_call.1} parent=19 // pred_fallthru
          _
      $region20: #{tpu_custom_call.1} parent=5 // pred_fallthru
        _
      %p147 = scmp.le.s32.totalorder 1, %s15
      %p148 = scmp.lt.s32.totalorder %s15, 3
      %p149 = pnand %p147, %p148
      %p150 = pneg %p149
      // Predicated region
      $region25: #{tpu_custom_call.1} parent=5 // pred_check
        _
      $region26: #{tpu_custom_call.1} parent=5 // pred_check_branch
        %152 = sbr.rel (%p149) target = $region28
      $region27: #{tpu_custom_call.1} parent=5 // pred_region
        %s153 = ssub.s32 %s15, 1
        %s154 = sand.u32 %s28, 1
        %s155 = scalar_lea.sflag [#allocation3], %s154
        %s156 = sand.u32 %s28, 1
        %s157 = smul.addr %s156, 192
        %s158 = scalar_lea.vmem [#allocation2], %s157
        // Predicated region
        $region29: #{tpu_custom_call.1} parent=27 // pred_check
          %p159 = pneg %p41
        $region30: #{tpu_custom_call.1} parent=27 // pred_check_branch
          %161 = sbr.rel (%p159) target = $region32
        $region31: #{tpu_custom_call.1} parent=27 // pred_region
          %162 = dma.done %s155, 3072
        $region32: #{tpu_custom_call.1} parent=27 // pred_fallthru
          _
        // Predicated region
        $region33: #{tpu_custom_call.1} parent=27 // pred_check
          %p163 = pneg %p62
        $region34: #{tpu_custom_call.1} parent=27 // pred_check_branch
          %165 = sbr.rel (%p163) target = $region36
        $region35: #{tpu_custom_call.1} parent=27 // pred_region
          %166 = dma.done [#allocation5], 16
        $region36: #{tpu_custom_call.1} parent=27 // pred_fallthru
          _
        %167 = sfence
        %s168 = sand.u32 %s28, 1
        %s169 = scalar_lea.sflag [#allocation3], %s168
        %s170 = sand.u32 %s28, 1
        %s171 = smul.addr %s170, 192
        %s172 = scalar_lea.vmem [#allocation2], %s171
        %p173 = pneg %p41
        %p174 = pneg %p38
        %p175 = pneg %p62
        %p176 = pneg %p59
        %p177 = pneg %p88
        %p178 = pneg %p85
        %s179 = sand.u32 %s75, 1
        %s180 = scalar_lea.sflag [#allocation4], %s179
        %s181 = sand.u32 %s75, 1
        %s182 = smul.addr %s181, 192
        %s183 = scalar_lea.vmem [#allocation7], %s182
        %s184 = smul.u32 3, %s20
        %s185 = ssub.s32 5, %s184
        %p186 = scmp.lt.s32.totalorder %s185, 3
        %s187 = scalar_select %p186, %s185, 3
        %s188 = smul.u32 128, %s187
        %s189 = smul.u32 %s188, 8
        %s190 = smul.u32 3, %s20
        %s191 = ssub.s32 5, %s190
        %p192 = scmp.lt.s32.totalorder %s191, 3
        %s193 = scalar_select %p192, %s191, 3
        %s194 = smul.u32 128, %s193
        %s195 = smul.u32 %s194, 8
        %s196 = sld [smem:[#allocation6]]
        %s197 = sld [smem:[#allocation6 + $0x1]]
        %v198 = vld [vmem:[%s158] sm:$0xff]
        %v199 = vld [vmem:[%s158 + $0x8] sm:$0xff]
        %v200 = vld [vmem:[%s158 + $0x10] sm:$0xff]
        %v201 = vld [vmem:[%s158 + $0x18] sm:$0xff]
        %v202 = vld [vmem:[%s158 + $0x20] sm:$0xff]
        %v203 = vld [vmem:[%s158 + $0x28] sm:$0xff]
        %v204 = vld [vmem:[%s158 + $0x30] sm:$0xff]
        %v205 = vld [vmem:[%s158 + $0x38] sm:$0xff]
        %v206 = vld [vmem:[%s158 + $0x40] sm:$0xff]
        %v207 = vld [vmem:[%s158 + $0x48] sm:$0xff]
        %v208 = vld [vmem:[%s158 + $0x50] sm:$0xff]
        %v209 = vld [vmem:[%s158 + $0x58] sm:$0xff]
        %v210 = vld [vmem:[%s158 + $0x60] sm:$0xff]
        %v211 = vld [vmem:[%s158 + $0x68] sm:$0xff]
        %v212 = vld [vmem:[%s158 + $0x70] sm:$0xff]
        %v213 = vld [vmem:[%s158 + $0x78] sm:$0xff]
        %v214 = vld [vmem:[%s158 + $0x80] sm:$0xff]
        %v215 = vld [vmem:[%s158 + $0x88] sm:$0xff]
        %v216 = vld [vmem:[%s158 + $0x90] sm:$0xff]
        %v217 = vld [vmem:[%s158 + $0x98] sm:$0xff]
        %v218 = vld [vmem:[%s158 + $0xa0] sm:$0xff]
        %v219 = vld [vmem:[%s158 + $0xa8] sm:$0xff]
        %v220 = vld [vmem:[%s158 + $0xb0] sm:$0xff]
        %v221 = vld [vmem:[%s158 + $0xb8] sm:$0xff]
        %v222 = vstv %s196
        %v223 = vmul.f32 %v198, %v222
        %v224 = vmul.f32 %v199, %v222
        %v225 = vmul.f32 %v200, %v222
        %v226 = vmul.f32 %v201, %v222
        %v227 = vmul.f32 %v202, %v222
        %v228 = vmul.f32 %v203, %v222
        %v229 = vmul.f32 %v204, %v222
        %v230 = vmul.f32 %v205, %v222
        %v231 = vmul.f32 %v206, %v222
        %v232 = vmul.f32 %v207, %v222
        %v233 = vmul.f32 %v208, %v222
        %v234 = vmul.f32 %v209, %v222
        %v235 = vmul.f32 %v210, %v222
        %v236 = vmul.f32 %v211, %v222
        %v237 = vmul.f32 %v212, %v222
        %v238 = vmul.f32 %v213, %v222
        %v239 = vmul.f32 %v214, %v222
        %v240 = vmul.f32 %v215, %v222
        %v241 = vmul.f32 %v216, %v222
        %v242 = vmul.f32 %v217, %v222
        %v243 = vmul.f32 %v218, %v222
        %v244 = vmul.f32 %v219, %v222
        %v245 = vmul.f32 %v220, %v222
        %v246 = vmul.f32 %v221, %v222
        %v247 = vstv %s197
        %v248 = vadd.f32 %v223, %v247
        %v249 = vadd.f32 %v224, %v247
        %v250 = vadd.f32 %v225, %v247
        %v251 = vadd.f32 %v226, %v247
        %v252 = vadd.f32 %v227, %v247
        %v253 = vadd.f32 %v228, %v247
        %v254 = vadd.f32 %v229, %v247
        %v255 = vadd.f32 %v230, %v247
        %v256 = vadd.f32 %v231, %v247
        %v257 = vadd.f32 %v232, %v247
        %v258 = vadd.f32 %v233, %v247
        %v259 = vadd.f32 %v234, %v247
        %v260 = vadd.f32 %v235, %v247
        %v261 = vadd.f32 %v236, %v247
        %v262 = vadd.f32 %v237, %v247
        %v263 = vadd.f32 %v238, %v247
        %v264 = vadd.f32 %v239, %v247
        %v265 = vadd.f32 %v240, %v247
        %v266 = vadd.f32 %v241, %v247
        %v267 = vadd.f32 %v242, %v247
        %v268 = vadd.f32 %v243, %v247
        %v269 = vadd.f32 %v244, %v247
        %v270 = vadd.f32 %v245, %v247
        %v271 = vadd.f32 %v246, %v247
        %272 = vst [vmem:[%s183] sm:$0xff] %v248
        %273 = vst [vmem:[%s183 + $0x8] sm:$0xff] %v249
        %274 = vst [vmem:[%s183 + $0x10] sm:$0xff] %v250
        %275 = vst [vmem:[%s183 + $0x18] sm:$0xff] %v251
        %276 = vst [vmem:[%s183 + $0x20] sm:$0xff] %v252
        %277 = vst [vmem:[%s183 + $0x28] sm:$0xff] %v253
        %278 = vst [vmem:[%s183 + $0x30] sm:$0xff] %v254
        %279 = vst [vmem:[%s183 + $0x38] sm:$0xff] %v255
        %280 = vst [vmem:[%s183 + $0x40] sm:$0xff] %v256
        %281 = vst [vmem:[%s183 + $0x48] sm:$0xff] %v257
        %282 = vst [vmem:[%s183 + $0x50] sm:$0xff] %v258
        %283 = vst [vmem:[%s183 + $0x58] sm:$0xff] %v259
        %284 = vst [vmem:[%s183 + $0x60] sm:$0xff] %v260
        %285 = vst [vmem:[%s183 + $0x68] sm:$0xff] %v261
        %286 = vst [vmem:[%s183 + $0x70] sm:$0xff] %v262
        %287 = vst [vmem:[%s183 + $0x78] sm:$0xff] %v263
        %288 = vst [vmem:[%s183 + $0x80] sm:$0xff] %v264
        %289 = vst [vmem:[%s183 + $0x88] sm:$0xff] %v265
        %290 = vst [vmem:[%s183 + $0x90] sm:$0xff] %v266
        %291 = vst [vmem:[%s183 + $0x98] sm:$0xff] %v267
        %292 = vst [vmem:[%s183 + $0xa0] sm:$0xff] %v268
        %293 = vst [vmem:[%s183 + $0xa8] sm:$0xff] %v269
        %294 = vst [vmem:[%s183 + $0xb0] sm:$0xff] %v270
        %295 = vst [vmem:[%s183 + $0xb8] sm:$0xff] %v271
        %s296 = sand.u32 %s75, 1
        %s297 = scalar_lea.sflag [#allocation4], %s296
        %s298 = sand.u32 %s75, 1
        %s299 = smul.addr %s298, 192
        %s300 = scalar_lea.vmem [#allocation7], %s299
        // Predicated region
        $region37: #{tpu_custom_call.1} parent=27 // pred_check
          %p301 = pneg %p85
        $region38: #{tpu_custom_call.1} parent=27 // pred_check_branch
          %303 = sbr.rel (%p301) target = $region40
        $region39: #{tpu_custom_call.1} parent=27 // pred_region
          %s304 = smul.u32 3, %s20
          %s305 = ssub.s32 5, %s304
          %p306 = scmp.lt.s32.totalorder %s305, 3
          %s307 = scalar_select %p306, %s305, 3
          %s308 = smul.u32 128, %s307
          %s309 = smul.u32 %s308, 8
          %s311 = ssub.s32 3072, %s309
          %312 = vsyncadd %s297, %s311
          %p313 = scmp.ne.s32.totalorder 0, %s309
          %s314 = smul.addr %s304, 8
          %s315 = smul.addr %s314, 128
          %s316 = scalar_lea.hbm %s2, %s315
          %s317 = smul.u32 64, %s307
          %s318 = sshll.u32 %s300, 4
          %s319 = int_to_ptr.vmem [resolvable:$true] %s318
          %s320 = sshll.u32 %s317, 4
          %324 = dma.vmem_to_hbm [thread:$0]  (%p313), %s319, %s320, %s316, %s297, 1024, 1024, 64
        $region40: #{tpu_custom_call.1} parent=27 // pred_fallthru
          _
      $region28: #{tpu_custom_call.1} parent=5 // pred_fallthru
        _
      %p325 = scmp.le.s32.totalorder 2, %s15
      // Predicated region
      $region41: #{tpu_custom_call.1} parent=5 // pred_check
        %p326 = pneg %p325
      $region42: #{tpu_custom_call.1} parent=5 // pred_check_branch
        %328 = sbr.rel (%p326) target = $region44
      $region43: #{tpu_custom_call.1} parent=5 // pred_region
        %s329 = ssub.s32 %s15, 2
        // Predicated region
        $region45: #{tpu_custom_call.1} parent=43 // pred_check
          %p330 = pneg %p91
        $region46: #{tpu_custom_call.1} parent=43 // pred_check_branch
          %332 = sbr.rel (%p330) target = $region48
        $region47: #{tpu_custom_call.1} parent=43 // pred_region
          %s333 = sand.u32 %s76, 1
          %s334 = scalar_lea.sflag [#allocation4], %s333
          %s335 = sand.u32 %s76, 1
          %s336 = smul.addr %s335, 192
          %s337 = scalar_lea.vmem [#allocation7], %s336
          %338 = dma.done %s334, 3072
        $region48: #{tpu_custom_call.1} parent=43 // pred_fallthru
          _
      $region44: #{tpu_custom_call.1} parent=5 // pred_fallthru
        _
    $region6: #{tpu_custom_call.1} parent=1 // loop_footer
      %s19 = sadd.s32 1, %s15
    $region7: #{tpu_custom_call.1} parent=1 // loop_footer_branch
      %14 = sbr.rel target = $region3
    $region8: #{tpu_custom_call.1} parent=1 // loop_exit
      _
    %339 = vsyncpa [#allocation3], 1
    %s340 = scalar_lea.sflag [#allocation3], 1
    %341 = vsyncpa %s340, 1
    %342 = vsyncpa [#allocation4], 1
    %s343 = scalar_lea.sflag [#allocation4], 1
    %344 = vsyncpa %s343, 1
    %345 = vsyncpa [#allocation5], 1
    %s346 = scalar_lea.sflag [#allocation5], 1
    %347 = vsyncpa %s346, 1

</llo_original>
